<compile_context>
chip_gen: v7x
topology: tpu7x:2x2x1
jax: 0.10.0
libtpu: 0.0.40
codegen_flags: <defaults>
</compile_context>

<pallas_src>
import functools

import jax
import jax.numpy as jnp
from jax.experimental import pallas as pl
from jax.experimental.pallas import tpu as pltpu


# ----------------------------------------------------------------------------
# Tiling helpers
# ----------------------------------------------------------------------------
def _round_up(x, m):
    return (x + m - 1) // m * m


def _tile_sizes(M, N, K):
    """Pick (tm, tn, tk) per TPU generation, clamped to the (padded) problem."""
    try:
        kind = jax.devices()[0].device_kind.lower()
    except Exception:  # pragma: no cover - defensive
        kind = ""
    tm_pref = 128 if "v5" in kind else 256          # v5e MXU is 128x128; v6e/v7x 256x256
    tm = min(tm_pref, _round_up(M, 8))              # sublane multiple
    tn = min(256, _round_up(N, 128))                # lane-dense output stores
    tk = min(256, _round_up(K, 128))                # K reduction tile
    return tm, tn, tk


def _pad2d(x, rows, cols, dtype):
    x = x.astype(dtype)
    pr, pc = rows - x.shape[0], cols - x.shape[1]
    if pr or pc:
        x = jnp.pad(x, ((0, pr), (0, pc)))
    return x


# ----------------------------------------------------------------------------
# Kernels
# ----------------------------------------------------------------------------
def _agg_matmul_kernel(a_ref, b_ref, bias_ref, o_ref, acc_ref, *, apply_relu):
    """One (tm, tn) output tile of  relu?(A @ B + bias), K-tiled accumulation."""
    @pl.when(pl.program_id(2) == 0)
    def _init():
        acc_ref[...] = jnp.zeros_like(acc_ref)

    acc_ref[...] += jnp.dot(a_ref[...], b_ref[...],
                            preferred_element_type=jnp.float32)

    @pl.when(pl.program_id(2) == pl.num_programs(2) - 1)
    def _finalize():
        acc = acc_ref[...] + bias_ref[...]
        if apply_relu:
            acc = jnp.maximum(acc, 0.0)
        o_ref[...] = acc.astype(o_ref.dtype)


def _fused_layer_kernel(adj_ref, h_ref, w_ref, bias_ref, o_ref, acc_ref, *,
                        apply_relu):
    """One (tm, tn) tile of  relu?(adj @ (h @ W) + bias), fused per K tile."""
    @pl.when(pl.program_id(2) == 0)
    def _init():
        acc_ref[...] = jnp.zeros_like(acc_ref)

    # Feature transform for this K tile: (tk, Cin) @ (Cin, tn) -> (tk, tn).
    z = jnp.dot(h_ref[...], w_ref[...], preferred_element_type=jnp.float32)
    # Aggregation: (tm, tk) @ (tk, tn) -> accumulate in f32.
    acc_ref[...] += jnp.dot(adj_ref[...], z.astype(adj_ref.dtype),
                            preferred_element_type=jnp.float32)

    @pl.when(pl.program_id(2) == pl.num_programs(2) - 1)
    def _finalize():
        acc = acc_ref[...] + bias_ref[...]
        if apply_relu:
            acc = jnp.maximum(acc, 0.0)
        o_ref[...] = acc.astype(o_ref.dtype)


_COMPILER_PARAMS = pltpu.CompilerParams(
    dimension_semantics=("parallel", "parallel", "arbitrary"),
    vmem_limit_bytes=32 * 1024 * 1024,
)


# ----------------------------------------------------------------------------
# Wrappers
# ----------------------------------------------------------------------------
def gcn_aggregate(adj, b, bias, *, apply_relu=False,
                  compute_dtype=jnp.bfloat16):
    """relu?(adj @ b + bias) — used for the identity-feature layer-1 shortcut."""
    M, K = adj.shape
    K2, N = b.shape
    assert K == K2, (adj.shape, b.shape)
    tm, tn, tk = _tile_sizes(M, N, K)
    Mp, Np, Kp = _round_up(M, tm), _round_up(N, tn), _round_up(K, tk)

    a_p = _pad2d(adj, Mp, Kp, compute_dtype)
    b_p = _pad2d(b, Kp, Np, compute_dtype)
    bias_p = _pad2d(bias.reshape(1, -1), 1, Np, jnp.float32)

    kernel = functools.partial(_agg_matmul_kernel, apply_relu=apply_relu)
    out = pl.pallas_call(
        kernel,
        out_shape=jax.ShapeDtypeStruct((Mp, Np), jnp.float32),
        grid_spec=pltpu.PrefetchScalarGridSpec(
            num_scalar_prefetch=0,
            grid=(Mp // tm, Np // tn, Kp // tk),
            in_specs=[
                pl.BlockSpec((tm, tk), lambda i, j, k: (i, k)),   # adj row tile
                pl.BlockSpec((tk, tn), lambda i, j, k: (k, j)),   # B K-tile
                pl.BlockSpec((1, tn), lambda i, j, k: (0, j)),    # bias
            ],
            out_specs=pl.BlockSpec((tm, tn), lambda i, j, k: (i, j)),
            scratch_shapes=[pltpu.VMEM((tm, tn), jnp.float32)],
        ),
        compiler_params=_COMPILER_PARAMS,
    )(a_p, b_p, bias_p)
    return out[:M, :N]


def gcn_layer_fused(adj, h, w, bias, *, apply_relu=False,
                    compute_dtype=jnp.bfloat16):
    """relu?(adj @ (h @ w) + bias) fused into a single pallas_call."""
    M, K = adj.shape
    K2, Cin = h.shape
    Cin2, Cout = w.shape
    assert K == K2 and Cin == Cin2, (adj.shape, h.shape, w.shape)
    tm, tn, tk = _tile_sizes(M, Cout, K)
    Mp, Kp = _round_up(M, tm), _round_up(K, tk)
    Np = _round_up(Cout, tn)
    Cp = _round_up(Cin, 128)                     # lane-pad resident feature width

    adj_p = _pad2d(adj, Mp, Kp, compute_dtype)
    h_p = _pad2d(h, Kp, Cp, compute_dtype)
    w_p = _pad2d(w, Cp, Np, compute_dtype)
    bias_p = _pad2d(bias.reshape(1, -1), 1, Np, jnp.float32)

    kernel = functools.partial(_fused_layer_kernel, apply_relu=apply_relu)
    out = pl.pallas_call(
        kernel,
        out_shape=jax.ShapeDtypeStruct((Mp, Np), jnp.float32),
        grid_spec=pltpu.PrefetchScalarGridSpec(
            num_scalar_prefetch=0,
            grid=(Mp // tm, Np // tn, Kp // tk),
            in_specs=[
                pl.BlockSpec((tm, tk), lambda i, j, k: (i, k)),   # adj tile
                pl.BlockSpec((tk, Cp), lambda i, j, k: (k, 0)),   # feature K-tile
                pl.BlockSpec((Cp, tn), lambda i, j, k: (0, j)),   # weight col tile
                pl.BlockSpec((1, tn), lambda i, j, k: (0, j)),    # bias
            ],
            out_specs=pl.BlockSpec((tm, tn), lambda i, j, k: (i, j)),
            scratch_shapes=[pltpu.VMEM((tm, tn), jnp.float32)],
        ),
        compiler_params=_COMPILER_PARAMS,
    )(adj_p, h_p, w_p, bias_p)
    return out[:M, :Cout]


# ----------------------------------------------------------------------------
# GCN glue (normalization / init are plain JAX; the hot path is Pallas)
# ----------------------------------------------------------------------------
def gcn_norm_adj(edge_index, num_nodes):
    """Dense D^{-1/2} (A + I) D^{-1/2} with PyG's source->target flow."""
    src, dst = edge_index[0], edge_index[1]
    a = jnp.zeros((num_nodes, num_nodes), jnp.float32)
    a = a.at[dst, src].set(1.0)                                # message j -> i lands in row i
    a = jnp.maximum(a, jnp.eye(num_nodes, dtype=jnp.float32))  # add self loops
    deg = a.sum(axis=1)
    dinv = jnp.where(deg > 0, 1.0 / jnp.sqrt(deg), 0.0)
    return dinv[:, None] * a * dinv[None, :]


def gcn_forward(x, adj_norm, params, *, x_is_identity=False):
    w1, b1, w2, b2 = params
    if x_is_identity:
        # x @ W1 == W1 for one-hot node features: skip the transform matmul.
        h1 = gcn_aggregate(adj_norm, w1, b1, apply_relu=True)
    else:
        h1 = gcn_layer_fused(adj_norm, x, w1, b1, apply_relu=True)
    out = gcn_layer_fused(adj_norm, h1, w2, b2, apply_relu=False)
    return out


def init_params(key, in_channels, hidden_channels, out_channels):
    k1, k2 = jax.random.split(key)

    def glorot(k, fan_in, fan_out):
        lim = jnp.sqrt(6.0 / (fan_in + fan_out))
        return jax.random.uniform(k, (fan_in, fan_out), jnp.float32, -lim, lim)

    w1 = glorot(k1, in_channels, hidden_channels)
    b1 = jnp.zeros((hidden_channels,), jnp.float32)
    w2 = glorot(k2, hidden_channels, out_channels)
    b2 = jnp.zeros((out_channels,), jnp.float32)
    return (w1, b1, w2, b2)


if __name__ == "__main__":
    # Small synthetic graph standing in for the KG edge list (no file I/O).
    num_nodes = 64
    num_edges = 256
    in_channels = num_nodes        # x = identity (one-hot per node), as in the script
    hidden_channels = 32
    out_channels = 16

    key = jax.random.PRNGKey(0)
    k_edges, k_params = jax.random.split(key)
    k_src, k_dst = jax.random.split(k_edges)
    src = jax.random.randint(k_src, (num_edges,), 0, num_nodes, dtype=jnp.int32)
    dst = jax.random.randint(k_dst, (num_edges,), 0, num_nodes, dtype=jnp.int32)
    edge_index = jnp.stack([src, dst], axis=0)

    x = jnp.eye(num_nodes, dtype=jnp.float32)
    adj_norm = gcn_norm_adj(edge_index, num_nodes)
    params = init_params(k_params, in_channels, hidden_channels, out_channels)

    out = gcn_forward(x, adj_norm, params, x_is_identity=True)
    jax.block_until_ready(out)

    # Pure-JAX reference, emulating the kernel's bf16 MXU operands (f32 accum).
    w1, b1, w2, b2 = params

    def _bf(v):
        return v.astype(jnp.bfloat16).astype(jnp.float32)

    h1_ref = jnp.maximum(_bf(adj_norm) @ _bf(x @ w1) + b1, 0.0)
    z2_ref = _bf(h1_ref) @ _bf(w2)
    out_ref = _bf(adj_norm) @ _bf(z2_ref) + b2

    assert out.shape == (num_nodes, out_channels)
    assert jnp.allclose(out, out_ref, atol=1e-2, rtol=1e-2), float(
        jnp.max(jnp.abs(out - out_ref)))

    print("KERNEL_OK")
</pallas_src>

<mosaic_0001>
module attributes {stable_mosaic.version = 11 : i64} {
  func.func @_agg_matmul_kernel(%arg0: i32, %arg1: i32, %arg2: i32, %arg3: memref<64x128xbf16, #tpu.memory_space<vmem>>, %arg4: memref<128x128xbf16, #tpu.memory_space<vmem>>, %arg5: memref<1x128xf32, #tpu.memory_space<vmem>>, %arg6: memref<64x128xf32, #tpu.memory_space<vmem>>, %arg7: memref<64x128xf32, #tpu.memory_space<vmem>>) attributes {dimension_semantics = [#tpu.dimension_semantics<parallel>, #tpu.dimension_semantics<parallel>, #tpu.dimension_semantics<arbitrary>], iteration_bounds = array<i64: 1, 1, 1>, scalar_prefetch = 0 : i64, scratch_operands = 1 : i64, tpu.core_type = #tpu.core_type<tc>, window_params = [{transform_indices = @transform_0, window_bounds = array<i64: 64, 128>}, {transform_indices = @transform_1, window_bounds = array<i64: 128, 128>}, {transform_indices = @transform_2, window_bounds = array<i64: 1, 128>}, {transform_indices = @transform_3, window_bounds = array<i64: 64, 128>}]} {
    %c0_i32 = arith.constant 0 : i32
    %0 = arith.cmpi eq, %arg2, %c0_i32 : i32
    %1 = arith.extui %0 : i1 to i32
    %c0_i32_0 = arith.constant 0 : i32
    %2 = arith.cmpi ne, %1, %c0_i32_0 : i32
    scf.if %2 {
      %cst_10 = arith.constant 0.000000e+00 : f32
      %12 = vector.broadcast %cst_10 : f32 to vector<64x128xf32>
      %c0_11 = arith.constant 0 : index
      %c0_12 = arith.constant 0 : index
      %13 = vector.load %arg7[%c0_11, %c0_12] : memref<64x128xf32, #tpu.memory_space<vmem>>, vector<64x128xf32>
      tpu.vector_store %arg7[%c0_11, %c0_12], %12 {strides = array<i32>} : memref<64x128xf32, #tpu.memory_space<vmem>>, vector<64x128xf32>,
    } else {
    }
    %c0 = arith.constant 0 : index
    %c0_1 = arith.constant 0 : index
    %3 = vector.load %arg7[%c0, %c0_1] : memref<64x128xf32, #tpu.memory_space<vmem>>, vector<64x128xf32>
    %c0_2 = arith.constant 0 : index
    %c0_3 = arith.constant 0 : index
    %4 = vector.load %arg3[%c0_2, %c0_3] : memref<64x128xbf16, #tpu.memory_space<vmem>>, vector<64x128xbf16>
    %c0_4 = arith.constant 0 : index
    %c0_5 = arith.constant 0 : index
    %5 = vector.load %arg4[%c0_4, %c0_5] : memref<128x128xbf16, #tpu.memory_space<vmem>>, vector<128x128xbf16>
    %cst = arith.constant dense<0.000000e+00> : vector<64x128xf32>
    %6 = tpu.matmul %4, %5, %cst {dimension_numbers = #tpu.dot_dimension_numbers<[1], [0], [0], [1], [0, 0, 1, 1], [], []>} : vector<64x128xbf16>, vector<128x128xbf16>, vector<64x128xf32> -> vector<64x128xf32>
    %7 = arith.addf %3, %6 : vector<64x128xf32>
    %c0_6 = arith.constant 0 : index
    %c0_7 = arith.constant 0 : index
    %8 = vector.load %arg7[%c0_6, %c0_7] : memref<64x128xf32, #tpu.memory_space<vmem>>, vector<64x128xf32>
    tpu.vector_store %arg7[%c0_6, %c0_7], %7 {strides = array<i32>} : memref<64x128xf32, #tpu.memory_space<vmem>>, vector<64x128xf32>,
    %c0_i32_8 = arith.constant 0 : i32
    %9 = arith.cmpi eq, %arg2, %c0_i32_8 : i32
    %10 = arith.extui %9 : i1 to i32
    %c0_i32_9 = arith.constant 0 : i32
    %11 = arith.cmpi ne, %10, %c0_i32_9 : i32
    scf.if %11 {
      %c0_10 = arith.constant 0 : index
      %c0_11 = arith.constant 0 : index
      %12 = vector.load %arg7[%c0_10, %c0_11] : memref<64x128xf32, #tpu.memory_space<vmem>>, vector<64x128xf32>
      %c0_12 = arith.constant 0 : index
      %c0_13 = arith.constant 0 : index
      %13 = vector.load %arg5[%c0_12, %c0_13] : memref<1x128xf32, #tpu.memory_space<vmem>>, vector<1x128xf32>
      %14 = vector.broadcast %13 : vector<1x128xf32> to vector<64x128xf32>
      %15 = arith.addf %12, %14 : vector<64x128xf32>
      %cst_14 = arith.constant 0.000000e+00 : f32
      %16 = vector.broadcast %cst_14 : f32 to vector<64x128xf32>
      %17 = arith.maximumf %15, %16 : vector<64x128xf32>
      %c0_15 = arith.constant 0 : index
      %c0_16 = arith.constant 0 : index
      %18 = vector.load %arg6[%c0_15, %c0_16] : memref<64x128xf32, #tpu.memory_space<vmem>>, vector<64x128xf32>
      tpu.vector_store %arg6[%c0_15, %c0_16], %17 {strides = array<i32>} : memref<64x128xf32, #tpu.memory_space<vmem>>, vector<64x128xf32>,
    } else {
    }
    return
  }
  func.func @transform_0(%arg0: i32, %arg1: i32, %arg2: i32) -> (i32, i32) {
    %c0_i32 = arith.constant 0 : i32
    return %arg0, %arg2 : i32, i32
  }
  func.func @transform_1(%arg0: i32, %arg1: i32, %arg2: i32) -> (i32, i32) {
    %c0_i32 = arith.constant 0 : i32
    return %arg2, %arg1 : i32, i32
  }
  func.func @transform_2(%arg0: i32, %arg1: i32, %arg2: i32) -> (i32, i32) {
    %c0_i32 = arith.constant 0 : i32
    %c0_i32_0 = arith.constant 0 : i32
    return %c0_i32, %arg1 : i32, i32
  }
  func.func @transform_3(%arg0: i32, %arg1: i32, %arg2: i32) -> (i32, i32) {
    %c0_i32 = arith.constant 0 : i32
    return %arg0, %arg1 : i32, i32
  }
}

</mosaic_0001>

<llo_original>
// kernel: tpu_custom_call.1
$region0: #{tpu_custom_call.1}
  #allocation0 [shape = 'u32[]', space=smem, size = 0x4, offset = 0x4, fixed_abs, tag = 'smem constant byte address 0x4 - core index']
  #allocation1 [shape = 'u32[144,128]{1,0:T(1,128)}', space=vmem, size = 0x12000, scoped, tag = 'internal scratch']
  #allocation2 [shape = 'f32[64,128]{1,0:T(8,128)}', space=vmem, size = 0x8000, scoped, tag = 'scratch operand']
  %s0 = inlined_call_operand.hbm [shape: bf16[64,128], index: 0, kind: input, shape index: {}]
  %s1 = inlined_call_operand.hbm [shape: bf16[128,128], index: 1, kind: input, shape index: {}]
  %s2 = inlined_call_operand.vmem [shape: f32[1,128], index: 2, kind: input, shape index: {}]
  %s3 = inlined_call_operand.hbm [shape: f32[64,128], index: 3, kind: output, shape index: {}]
  %s4 = sld [smem:[#allocation0]]
  $region38: #{tpu_custom_call.1} parent=0
    _
  %s6 = ssub.s32 1, %s4
  %s7 = scalar_select 0, %s6, %s4
  $region1: #{tpu_custom_call.1} parent=0
    #allocation3 [shape = 'u8[16384]{0}', space=vmem, size = 0x4000, scoped, tag = 'input window, operand 0, single buffered']
    #allocation4 [shape = 's32[1]{0}', space=sflag, size = 0x4, scoped, tag = 'scoped memory for tpu_custom_call.1']
    #allocation5 [shape = 's32[1]{0}', space=sflag, size = 0x4, scoped, tag = 'scoped memory for tpu_custom_call.1']
    #allocation6 [shape = 'u8[32768]{0}', space=vmem, size = 0x8000, scoped, tag = 'input window, operand 1, single buffered']
    #allocation7 [shape = 's32[1]{0}', space=sflag, size = 0x4, scoped, tag = 'scoped memory for tpu_custom_call.1']
    #allocation8 [shape = 'u8[32768]{0}', space=vmem, size = 0x8000, scoped, tag = 'output window, operand 0, single buffered']
    %8 = vsyncpa [#allocation4], 0
    %9 = vsyncpa [#allocation7], 0
    %10 = vsyncpa [#allocation5], 0
    // Predicated region
    $region2: #{tpu_custom_call.1} parent=1 // pred_check
      _
    $region3: #{tpu_custom_call.1} parent=1 // pred_check_branch
      %12 = sbr.rel (0) target = $region5
    $region4: #{tpu_custom_call.1} parent=1 // pred_region
      %s14 = ssub.s32 512, 512
      %15 = vsyncadd [#allocation4], %s14
      %s16 = sshll.u32 [#allocation3], 4
      %s17 = int_to_ptr.vmem [resolvable:$true] %s16
      %22 = dma.hbm_to_vmem [thread:$0]  %s0, 512, %s17, [#allocation4], 64, 64, 4
    $region5: #{tpu_custom_call.1} parent=1 // pred_fallthru
      _
    // Predicated region
    $region6: #{tpu_custom_call.1} parent=1 // pred_check
      _
    $region7: #{tpu_custom_call.1} parent=1 // pred_check_branch
      %24 = sbr.rel (0) target = $region9
    $region8: #{tpu_custom_call.1} parent=1 // pred_region
      %s26 = ssub.s32 1024, 1024
      %27 = vsyncadd [#allocation7], %s26
      %s28 = sshll.u32 [#allocation6], 4
      %s29 = int_to_ptr.vmem [resolvable:$true] %s28
      %34 = dma.hbm_to_vmem [thread:$0]  %s1, 1024, %s29, [#allocation7], 64, 64, 4
    $region9: #{tpu_custom_call.1} parent=1 // pred_fallthru
      _
    // Predicated region
    $region10: #{tpu_custom_call.1} parent=1 // pred_check
      _
    $region11: #{tpu_custom_call.1} parent=1 // pred_check_branch
      %36 = sbr.rel (0) target = $region13
    $region12: #{tpu_custom_call.1} parent=1 // pred_region
      _
    $region13: #{tpu_custom_call.1} parent=1 // pred_fallthru
      _
    // Predicated region
    $region14: #{tpu_custom_call.1} parent=1 // pred_check
      _
    $region15: #{tpu_custom_call.1} parent=1 // pred_check_branch
      %38 = sbr.rel (0) target = $region17
    $region16: #{tpu_custom_call.1} parent=1 // pred_region
      %39 = dma.done [#allocation4], 512
    $region17: #{tpu_custom_call.1} parent=1 // pred_fallthru
      _
    // Predicated region
    $region18: #{tpu_custom_call.1} parent=1 // pred_check
      _
    $region19: #{tpu_custom_call.1} parent=1 // pred_check_branch
      %41 = sbr.rel (0) target = $region21
    $region20: #{tpu_custom_call.1} parent=1 // pred_region
      %42 = dma.done [#allocation7], 1024
    $region21: #{tpu_custom_call.1} parent=1 // pred_fallthru
      _
    %p44 = scmp.eq.s32.totalorder 0, 0
    // Predicated region
    $region22: #{tpu_custom_call.1} parent=1 // pred_check
      %p45 = pneg %p44
    $region23: #{tpu_custom_call.1} parent=1 // pred_check_branch
      %47 = sbr.rel (%p45) target = $region25
    $region24: #{tpu_custom_call.1} parent=1 // pred_region
      %48 = vst [vmem:[#allocation2] sm:$0xff] 0.0
      %49 = vst [vmem:[#allocation2 + $0x8] sm:$0xff] 0.0
      %50 = vst [vmem:[#allocation2 + $0x10] sm:$0xff] 0.0
      %51 = vst [vmem:[#allocation2 + $0x18] sm:$0xff] 0.0
      %52 = vst [vmem:[#allocation2 + $0x20] sm:$0xff] 0.0
      %53 = vst [vmem:[#allocation2 + $0x28] sm:$0xff] 0.0
      %54 = vst [vmem:[#allocation2 + $0x30] sm:$0xff] 0.0
      %55 = vst [vmem:[#allocation2 + $0x38] sm:$0xff] 0.0
    $region25: #{tpu_custom_call.1} parent=1 // pred_fallthru
      _
    %v56 = vld [vmem:[#allocation2] sm:$0xff]
    %v57 = vld [vmem:[#allocation2 + $0x8] sm:$0xff]
    %v58 = vld [vmem:[#allocation2 + $0x10] sm:$0xff]
    %v59 = vld [vmem:[#allocation2 + $0x18] sm:$0xff]
    %v60 = vld [vmem:[#allocation2 + $0x20] sm:$0xff]
    %v61 = vld [vmem:[#allocation2 + $0x28] sm:$0xff]
    %v62 = vld [vmem:[#allocation2 + $0x30] sm:$0xff]
    %v63 = vld [vmem:[#allocation2 + $0x38] sm:$0xff]
    %v64 = vld [vmem:[#allocation3] sm:$0xf]
    %v65 = vld [vmem:[#allocation3 + $0x4] sm:$0xf]
    %v66 = vld [vmem:[#allocation3 + $0x8] sm:$0xf]
    %v67 = vld [vmem:[#allocation3 + $0xc] sm:$0xf]
    %v68 = vld [vmem:[#allocation3 + $0x10] sm:$0xf]
    %v69 = vld [vmem:[#allocation3 + $0x14] sm:$0xf]
    %v70 = vld [vmem:[#allocation3 + $0x18] sm:$0xf]
    %v71 = vld [vmem:[#allocation3 + $0x1c] sm:$0xf]
    %v72 = vld [vmem:[#allocation6] sm:$0xf]
    %v73 = vld [vmem:[#allocation6 + $0x4] sm:$0xf]
    %v74 = vld [vmem:[#allocation6 + $0x8] sm:$0xf]
    %v75 = vld [vmem:[#allocation6 + $0xc] sm:$0xf]
    %v76 = vld [vmem:[#allocation6 + $0x10] sm:$0xf]
    %v77 = vld [vmem:[#allocation6 + $0x14] sm:$0xf]
    %v78 = vld [vmem:[#allocation6 + $0x18] sm:$0xf]
    %v79 = vld [vmem:[#allocation6 + $0x1c] sm:$0xf]
    %v80 = vld [vmem:[#allocation6 + $0x20] sm:$0xf]
    %v81 = vld [vmem:[#allocation6 + $0x24] sm:$0xf]
    %v82 = vld [vmem:[#allocation6 + $0x28] sm:$0xf]
    %v83 = vld [vmem:[#allocation6 + $0x2c] sm:$0xf]
    %v84 = vld [vmem:[#allocation6 + $0x30] sm:$0xf]
    %v85 = vld [vmem:[#allocation6 + $0x34] sm:$0xf]
    %v86 = vld [vmem:[#allocation6 + $0x38] sm:$0xf]
    %v87 = vld [vmem:[#allocation6 + $0x3c] sm:$0xf]
    %v96 = vunpack.c.l.b16 %v64
    %v97 = vunpack.c.l.b16 %v65
    %v98 = vunpack.c.l.b16 %v66
    %v99 = vunpack.c.l.b16 %v67
    %v100 = vunpack.c.l.b16 %v68
    %v101 = vunpack.c.l.b16 %v69
    %v102 = vunpack.c.l.b16 %v70
    %v103 = vunpack.c.l.b16 %v71
    %v104 = vpack.c.b16 %v97, %v96
    %v105 = vpack.c.b16 %v99, %v98
    %v106 = vpack.c.b16 %v101, %v100
    %v107 = vpack.c.b16 %v103, %v102
    %v128 = vunpack.c.l.b16 %v72
    %v129 = vunpack.c.l.b16 %v73
    %v130 = vunpack.c.l.b16 %v74
    %v131 = vunpack.c.l.b16 %v75
    %v132 = vunpack.c.l.b16 %v76
    %v133 = vunpack.c.l.b16 %v77
    %v134 = vunpack.c.l.b16 %v78
    %v135 = vunpack.c.l.b16 %v79
    %v136 = vunpack.c.l.b16 %v80
    %v137 = vunpack.c.l.b16 %v81
    %v138 = vunpack.c.l.b16 %v82
    %v139 = vunpack.c.l.b16 %v83
    %v140 = vunpack.c.l.b16 %v84
    %v141 = vunpack.c.l.b16 %v85
    %v142 = vunpack.c.l.b16 %v86
    %v143 = vunpack.c.l.b16 %v87
    %v144 = vpack.c.b16 %v129, %v128
    %v145 = vpack.c.b16 %v131, %v130
    %v146 = vpack.c.b16 %v133, %v132
    %v147 = vpack.c.b16 %v135, %v134
    %v148 = vpack.c.b16 %v137, %v136
    %v149 = vpack.c.b16 %v139, %v138
    %v150 = vpack.c.b16 %v141, %v140
    %v151 = vpack.c.b16 %v143, %v142
    %160 = vmatprep.subr.bf16.mxu0 0
    %161 = vmatpush1.bf16.msra.mxu0 %v144
    %162 = vmatprep.subr.bf16.mxu0 0
    %163 = vmatpush1.bf16.msra.mxu0 %v145
    %164 = vmatprep.subr.bf16.mxu0 0
    %165 = vmatpush1.bf16.msra.mxu0 %v146
    %166 = vmatprep.subr.bf16.mxu0 0
    %167 = vmatpush1.bf16.msra.mxu0 %v147
    %168 = vmatprep.subr.bf16.mxu0 0
    %169 = vmatpush1.bf16.msra.mxu0 %v148
    %170 = vmatprep.subr.bf16.mxu0 0
    %171 = vmatpush1.bf16.msra.mxu0 %v149
    %172 = vmatprep.subr.bf16.mxu0 0
    %173 = vmatpush1.bf16.msra.mxu0 %v150
    %174 = vmatprep.subr.bf16.mxu0 0
    %175 = vmatpush1.bf16.msra.mxu0 %v151
    %176 = vmatprep.subr.bf16.mxu0 0
    %177 = vmatpush1.bf16.msra.mxu0 0
    %178 = vmatprep.subr.bf16.mxu0 0
    %179 = vmatpush1.bf16.msra.mxu0 0
    %180 = vmatprep.subr.bf16.mxu0 0
    %181 = vmatpush1.bf16.msra.mxu0 0
    %182 = vmatprep.subr.bf16.mxu0 0
    %183 = vmatpush1.bf16.msra.mxu0 0
    %184 = vmatprep.subr.bf16.mxu0 0
    %185 = vmatpush1.bf16.msra.mxu0 0
    %186 = vmatprep.subr.bf16.mxu0 0
    %187 = vmatpush1.bf16.msra.mxu0 0
    %188 = vmatprep.subr.bf16.mxu0 0
    %189 = vmatpush1.bf16.msra.mxu0 0
    %190 = vmatprep.subr.bf16.mxu0 0
    %191 = vmatpush1.bf16.msra.mxu0 0
    %192 = vmatprep.mubr.bf16.mxu0 0
    %193 = vmatmul.mubr.bf16.gmra.mrb[0].mxu0 %v104
    %v194 = vpop.f32.mrb[0].mxu0
    %v195 = vadd.f32 0.0, %v194
    %v196 = vpop.f32.mrb[0].mxu0
    %v197 = vpop.f32.mrb[0].mxu0
    %v198 = vadd.f32 0.0, %v197
    %v199 = vpop.f32.mrb[0].mxu0
    %200 = vmatprep.mubr.bf16.mxu0 0
    %201 = vmatmul.mubr.bf16.gmra.mrb[0].mxu0 %v105
    %v202 = vpop.f32.mrb[0].mxu0
    %v203 = vadd.f32 0.0, %v202
    %v204 = vpop.f32.mrb[0].mxu0
    %v205 = vpop.f32.mrb[0].mxu0
    %v206 = vadd.f32 0.0, %v205
    %v207 = vpop.f32.mrb[0].mxu0
    %208 = vmatprep.mubr.bf16.mxu0 0
    %209 = vmatmul.mubr.bf16.gmra.mrb[0].mxu0 %v106
    %v210 = vpop.f32.mrb[0].mxu0
    %v211 = vadd.f32 0.0, %v210
    %v212 = vpop.f32.mrb[0].mxu0
    %v213 = vpop.f32.mrb[0].mxu0
    %v214 = vadd.f32 0.0, %v213
    %v215 = vpop.f32.mrb[0].mxu0
    %216 = vmatprep.mubr.bf16.mxu0 0
    %217 = vmatmul.mubr.bf16.gmra.mrb[0].mxu0 %v107
    %v218 = vpop.f32.mrb[0].mxu0
    %v219 = vadd.f32 0.0, %v218
    %v220 = vpop.f32.mrb[0].mxu0
    %v221 = vpop.f32.mrb[0].mxu0
    %v222 = vadd.f32 0.0, %v221
    %v223 = vpop.f32.mrb[0].mxu0
    %224 = vdwg.mxu0
    %v225 = vadd.f32 %v56, %v195
    %v226 = vadd.f32 %v57, %v198
    %v227 = vadd.f32 %v58, %v203
    %v228 = vadd.f32 %v59, %v206
    %v229 = vadd.f32 %v60, %v211
    %v230 = vadd.f32 %v61, %v214
    %v231 = vadd.f32 %v62, %v219
    %v232 = vadd.f32 %v63, %v222
    %233 = vst [vmem:[#allocation2] sm:$0xff] %v225
    %234 = vst [vmem:[#allocation2 + $0x8] sm:$0xff] %v226
    %235 = vst [vmem:[#allocation2 + $0x10] sm:$0xff] %v227
    %236 = vst [vmem:[#allocation2 + $0x18] sm:$0xff] %v228
    %237 = vst [vmem:[#allocation2 + $0x20] sm:$0xff] %v229
    %238 = vst [vmem:[#allocation2 + $0x28] sm:$0xff] %v230
    %239 = vst [vmem:[#allocation2 + $0x30] sm:$0xff] %v231
    %240 = vst [vmem:[#allocation2 + $0x38] sm:$0xff] %v232
    // Predicated region
    $region26: #{tpu_custom_call.1} parent=1 // pred_check
      %p241 = pneg %p44
    $region27: #{tpu_custom_call.1} parent=1 // pred_check_branch
      %243 = sbr.rel (%p241) target = $region29
    $region28: #{tpu_custom_call.1} parent=1 // pred_region
      %v244 = vld [vmem:[#allocation2] sm:$0xff]
      %v245 = vld [vmem:[#allocation2 + $0x8] sm:$0xff]
      %v246 = vld [vmem:[#allocation2 + $0x10] sm:$0xff]
      %v247 = vld [vmem:[#allocation2 + $0x18] sm:$0xff]
      %v248 = vld [vmem:[#allocation2 + $0x20] sm:$0xff]
      %v249 = vld [vmem:[#allocation2 + $0x28] sm:$0xff]
      %v250 = vld [vmem:[#allocation2 + $0x30] sm:$0xff]
      %v251 = vld [vmem:[#allocation2 + $0x38] sm:$0xff]
      %v252 = vld [vmem:[%s2] sm:$0x1]
      %v254 = vlaneseq
      %v255 = vshrl.u32 %v254, 7
      %v256 = vsub.s32 0, %v255
      %v257 = vrot.slane %v252, %v256
      %v259 = vadd.f32 %v244, %v257
      %v260 = vadd.f32 %v245, %v257
      %v261 = vadd.f32 %v246, %v257
      %v262 = vadd.f32 %v247, %v257
      %v263 = vadd.f32 %v248, %v257
      %v264 = vadd.f32 %v249, %v257
      %v265 = vadd.f32 %v250, %v257
      %v266 = vadd.f32 %v251, %v257
      %v267 = vmax.f32 %v259, 0.0
      %v268 = vmax.f32 %v260, 0.0
      %v269 = vmax.f32 %v261, 0.0
      %v270 = vmax.f32 %v262, 0.0
      %v271 = vmax.f32 %v263, 0.0
      %v272 = vmax.f32 %v264, 0.0
      %v273 = vmax.f32 %v265, 0.0
      %v274 = vmax.f32 %v266, 0.0
      %275 = vst [vmem:[#allocation8] sm:$0xff] %v267
      %276 = vst [vmem:[#allocation8 + $0x8] sm:$0xff] %v268
      %277 = vst [vmem:[#allocation8 + $0x10] sm:$0xff] %v269
      %278 = vst [vmem:[#allocation8 + $0x18] sm:$0xff] %v270
      %279 = vst [vmem:[#allocation8 + $0x20] sm:$0xff] %v271
      %280 = vst [vmem:[#allocation8 + $0x28] sm:$0xff] %v272
      %281 = vst [vmem:[#allocation8 + $0x30] sm:$0xff] %v273
      %282 = vst [vmem:[#allocation8 + $0x38] sm:$0xff] %v274
    $region29: #{tpu_custom_call.1} parent=1 // pred_fallthru
      _
    // Predicated region
    $region30: #{tpu_custom_call.1} parent=1 // pred_check
      _
    $region31: #{tpu_custom_call.1} parent=1 // pred_check_branch
      %284 = sbr.rel (0) target = $region33
    $region32: #{tpu_custom_call.1} parent=1 // pred_region
      %s286 = ssub.s32 1024, 1024
      %287 = vsyncadd [#allocation5], %s286
      %s288 = sshll.u32 [#allocation8], 4
      %s289 = int_to_ptr.vmem [resolvable:$true] %s288
      %294 = dma.vmem_to_hbm [thread:$0]  %s289, 1024, %s3, [#allocation5], 128, 128, 8
    $region33: #{tpu_custom_call.1} parent=1 // pred_fallthru
      _
    // Predicated region
    $region34: #{tpu_custom_call.1} parent=1 // pred_check
      _
    $region35: #{tpu_custom_call.1} parent=1 // pred_check_branch
      %296 = sbr.rel (0) target = $region37
    $region36: #{tpu_custom_call.1} parent=1 // pred_region
      %297 = dma.done [#allocation5], 1024
    $region37: #{tpu_custom_call.1} parent=1 // pred_fallthru
      _
    %298 = vsyncpa [#allocation4], 1
    %299 = vsyncpa [#allocation7], 1
    %300 = vsyncpa [#allocation5], 1

</llo_original>
